<compile_context>
chip_gen: v6e
topology: v6e:2x2x1
jax: 0.10.0
libtpu: 0.0.40
codegen_flags: <defaults>
</compile_context>

<pallas_src>
import jax
import jax.numpy as jnp
from jax import lax
from jax.experimental import pallas as pl
from jax.experimental.pallas import tpu as pltpu


def _fused_scale_kernel(x_ref, w1_ref, b1_ref, w2_ref, b2_ref, o_ref):
    """Two lane-dense MXU matmuls with f32 epilogues.

    x_ref : (1, TH, 3*(W+2)*Cin) f32  rows, the 3 kh-shifted padded rows concat'd on lanes
    w1_ref: (3*(W+2)*Cin, W*C1)  bf16 banded 3x3-conv matrix (BN1 scale folded in)
    b1_ref: (1, W*C1)            f32  BN1 shift, tiled per output column
    w2_ref: (W*C1, W*C2)         bf16 block-diagonal 1x1-conv matrix (BN2 scale folded in)
    b2_ref: (1, W*C2)            f32  BN2 shift, tiled per output column
    o_ref : (1, TH, W*C2)        f32  lane-dense output rows
    """
    x = x_ref[0].astype(w1_ref.dtype)

    # conv1 (3x3, pad=1) + BN1 + LeakyReLU(0.1): one matmul, f32 accumulate.
    y = jnp.dot(x, w1_ref[...], preferred_element_type=jnp.float32)
    y = y + b1_ref[...]
    y = jnp.maximum(y, 0.1 * y)

    # conv2 (1x1) + BN2 + LeakyReLU(0.1): one block-diagonal matmul.
    z = jnp.dot(y.astype(w2_ref.dtype), w2_ref[...], preferred_element_type=jnp.float32)
    z = z + b2_ref[...]
    z = jnp.maximum(z, 0.1 * z)

    o_ref[...] = z.reshape(o_ref.shape)


def _pick_block_h(H, W, Cin, C2, vmem_budget_bytes=6 << 20):
    """Largest TH (multiple of 8 dividing H) whose double-buffered in+out rows fit the budget.

    The budget is kept well under the scoped-VMEM defaults (16 MiB v5e / 32 MiB v6e,v7x);
    raise it (and pltpu.CompilerParams(vmem_limit_bytes=...)) per generation for big images.
    """
    if H % 8 != 0:
        return H                                       # full-extent block is always legal
    per_row_bytes = (3 * (W + 2) * Cin + W * C2) * 4 * 2   # f32, double-buffered in + out
    th = max(8, (vmem_budget_bytes // per_row_bytes) // 8 * 8)
    th = min(th, H)
    while H % th:
        th -= 8
    return th


def scale_forward(x_nchw, params, num_classes, *, block_h=None,
                  weight_dtype=jnp.bfloat16):
    """Mirrors scale.forward: pred(x).reshape(N, 3, H, W, num_classes + 5)."""
    w1, s1, b1, w2, s2, b2 = params
    N, Cin, H, W = x_nchw.shape
    C1 = w1.shape[2]
    C2 = w2.shape[1]
    Lin = (W + 2) * Cin

    TH = block_h if block_h is not None else _pick_block_h(H, W, Cin, C2)
    assert H % TH == 0 and (TH % 8 == 0 or TH == H)

    # ---- input layout prep (fused by XLA with the NCHW->NHWC transpose) ----
    x_nhwc = jnp.transpose(x_nchw, (0, 2, 3, 1))                       # NCHW -> NHWC
    xp = jnp.pad(x_nhwc, ((0, 0), (1, 1), (1, 1), (0, 0)))             # pad=1 for the 3x3 conv
    xrow = xp.reshape(N, H + 2, Lin)                                   # lane-dense rows
    xcat = jnp.concatenate(                                            # 3 kh-shifted copies on lanes
        [xrow[:, 0:H], xrow[:, 1:H + 1], xrow[:, 2:H + 2]], axis=-1)   # (N, H, 3*Lin)

    # ---- trace-time weight folding: BN scale -> weights, convs -> lane-dense matmuls ----
    # TODO(synk): for realistic detection-head sizes (large W / Cin) the dense banded weights
    #             grow as O(W^2*Cin*C1); switch to K-tiled per-tap matmuls with an "arbitrary"
    #             reduction grid axis over the weight slab to stay inside v7x's 64 MiB VMEM.
    w1s = w1.reshape(3, 3, Cin, C1) * s1.reshape(1, 1, 1, C1)          # fold BN1 scale
    j = jnp.arange(W + 2)[None, :]
    wi = jnp.arange(W)[:, None]
    d = j - wi                                                         # kw tap index = j - w
    valid = ((d >= 0) & (d < 3)).astype(w1s.dtype)
    taps = w1s[:, jnp.clip(d, 0, 2)] * valid[None, :, :, None, None]   # (3, W, W+2, Cin, C1)
    w1_big = taps.transpose(0, 2, 3, 1, 4).reshape(3 * Lin, W * C1).astype(weight_dtype)

    w2s = w2 * s2.reshape(1, C2)                                       # fold BN2 scale
    w2_big = (jnp.eye(W, dtype=w2s.dtype)[:, None, :, None] *
              w2s[None, :, None, :]).reshape(W * C1, W * C2).astype(weight_dtype)

    b1_row = jnp.tile(b1.reshape(C1), W).reshape(1, W * C1).astype(jnp.float32)
    b2_row = jnp.tile(b2.reshape(C2), W).reshape(1, W * C2).astype(jnp.float32)

    out_dense = pl.pallas_call(
        _fused_scale_kernel,
        out_shape=jax.ShapeDtypeStruct((N, H, W * C2), jnp.float32),
        grid_spec=pltpu.PrefetchScalarGridSpec(
            num_scalar_prefetch=0,
            grid=(N, H // TH),
            in_specs=[
                pl.BlockSpec((1, TH, 3 * Lin), lambda n, t: (n, t, 0)),
                pl.BlockSpec((3 * Lin, W * C1), lambda n, t: (0, 0)),
                pl.BlockSpec((1, W * C1), lambda n, t: (0, 0)),
                pl.BlockSpec((W * C1, W * C2), lambda n, t: (0, 0)),
                pl.BlockSpec((1, W * C2), lambda n, t: (0, 0)),
            ],
            out_specs=pl.BlockSpec((1, TH, W * C2), lambda n, t: (n, t, 0)),
        ),
        compiler_params=pltpu.CompilerParams(
            dimension_semantics=("parallel", "parallel")),
    )(xcat, w1_big, b1_row, w2_big, b2_row)

    out_nhwc = out_dense.reshape(N, H, W, C2)
    out_nchw = jnp.transpose(out_nhwc, (0, 3, 1, 2))                   # NHWC -> NCHW
    # Raw reshape of a contiguous NCHW tensor, exactly as torch's .reshape does.
    return out_nchw.reshape(N, 3, H, W, num_classes + 5)


def _reference_forward(x_nchw, params, num_classes):
    """Pure-JAX f32 reference (lax.conv) used to validate the Pallas kernel."""
    w1, s1, b1, w2, s2, b2 = params
    N, Cin, H, W = x_nchw.shape
    x = jnp.transpose(x_nchw, (0, 2, 3, 1))
    w1_hwio = w1.reshape(3, 3, Cin, -1)
    y = lax.conv_general_dilated(
        x, w1_hwio, window_strides=(1, 1), padding="SAME",
        dimension_numbers=("NHWC", "HWIO", "NHWC"))
    y = y * s1[0] + b1[0]
    y = jnp.where(y > 0, y, 0.1 * y)
    y = jnp.einsum("nhwc,cd->nhwd", y, w2)
    y = y * s2[0] + b2[0]
    y = jnp.where(y > 0, y, 0.1 * y)
    y = jnp.transpose(y, (0, 3, 1, 2))
    return y.reshape(N, 3, H, W, num_classes + 5)


def init_params(key, in_channels, num_classes):
    """Deterministic synthetic parameters (conv weights + folded BN scale/shift)."""
    Cin = in_channels // 2
    C1 = in_channels
    C2 = 3 * (4 + 1 + num_classes)
    eps = 1e-5
    ks = jax.random.split(key, 10)

    w1 = jax.random.normal(ks[0], (3, 3, Cin, C1), jnp.float32) * 0.1
    w1 = w1.reshape(9, Cin, C1)
    g1 = 1.0 + 0.1 * jax.random.normal(ks[1], (1, C1), jnp.float32)
    beta1 = 0.1 * jax.random.normal(ks[2], (1, C1), jnp.float32)
    m1 = 0.1 * jax.random.normal(ks[3], (1, C1), jnp.float32)
    v1 = jnp.abs(jax.random.normal(ks[4], (1, C1), jnp.float32)) + 0.5
    s1 = g1 / jnp.sqrt(v1 + eps)
    b1 = beta1 - m1 * s1

    w2 = jax.random.normal(ks[5], (C1, C2), jnp.float32) * 0.1
    g2 = 1.0 + 0.1 * jax.random.normal(ks[6], (1, C2), jnp.float32)
    beta2 = 0.1 * jax.random.normal(ks[7], (1, C2), jnp.float32)
    m2 = 0.1 * jax.random.normal(ks[8], (1, C2), jnp.float32)
    v2 = jnp.abs(jax.random.normal(ks[9], (1, C2), jnp.float32)) + 0.5
    s2 = g2 / jnp.sqrt(v2 + eps)
    b2 = beta2 - m2 * s2

    return (w1, s1, b1, w2, s2, b2)


if __name__ == "__main__":
    # Small shapes consistent with the module: scale(in_channels=8, num_classes=3);
    # forward input has in_channels // 2 = 4 channels.
    in_channels = 8
    num_classes = 3
    N, H, W = 2, 16, 16

    key = jax.random.PRNGKey(0)
    kx, kp = jax.random.split(key)
    x = jax.random.normal(kx, (N, in_channels // 2, H, W), jnp.float32)
    params = init_params(kp, in_channels, num_classes)

    # block_h=8 exercises the (batch, H-tile) grid; the auto-picker would choose the whole
    # (tiny) image here. The whole wrapper is jitted so pad/transpose/concat fuse upstream.
    fwd = jax.jit(lambda xx, pp: scale_forward(xx, pp, num_classes, block_h=8))
    out = jax.block_until_ready(fwd(x, params))
    ref = jax.block_until_ready(_reference_forward(x, params, num_classes))

    assert out.shape == (N, 3, H, W, num_classes + 5), out.shape
    # bf16 MXU path vs. f32 reference -> loosened tolerance (per review correctness note).
    max_err = float(jnp.max(jnp.abs(out - ref)))
    assert jnp.allclose(out, ref, atol=2e-2, rtol=2e-2), max_err

    print("KERNEL_OK")
</pallas_src>

<mosaic_0001>
module attributes {stable_mosaic.version = 11 : i64} {
  func.func @_fused_scale_kernel(%arg0: i32, %arg1: i32, %arg2: memref<1x8x216xf32, #tpu.memory_space<vmem>>, %arg3: memref<216x128xbf16, #tpu.memory_space<vmem>>, %arg4: memref<1x128xf32, #tpu.memory_space<vmem>>, %arg5: memref<128x384xbf16, #tpu.memory_space<vmem>>, %arg6: memref<1x384xf32, #tpu.memory_space<vmem>>, %arg7: memref<1x8x384xf32, #tpu.memory_space<vmem>>) attributes {dimension_semantics = [#tpu.dimension_semantics<parallel>, #tpu.dimension_semantics<parallel>], iteration_bounds = array<i64: 2, 2>, scalar_prefetch = 0 : i64, scratch_operands = 0 : i64, tpu.core_type = #tpu.core_type<tc>, window_params = [{transform_indices = @transform_0, window_bounds = array<i64: 1, 8, 216>}, {pipeline_mode = #tpu.pipeline_mode<synchronous>, transform_indices = @transform_1, window_bounds = array<i64: 216, 128>}, {pipeline_mode = #tpu.pipeline_mode<synchronous>, transform_indices = @transform_2, window_bounds = array<i64: 1, 128>}, {pipeline_mode = #tpu.pipeline_mode<synchronous>, transform_indices = @transform_3, window_bounds = array<i64: 128, 384>}, {pipeline_mode = #tpu.pipeline_mode<synchronous>, transform_indices = @transform_4, window_bounds = array<i64: 1, 384>}, {transform_indices = @transform_5, window_bounds = array<i64: 1, 8, 384>}]} {
    %c0 = arith.constant 0 : index
    %c0_0 = arith.constant 0 : index
    %c0_1 = arith.constant 0 : index
    %0 = vector.load %arg2[%c0, %c0_0, %c0_1] : memref<1x8x216xf32, #tpu.memory_space<vmem>>, vector<1x8x216xf32>
    %1 = vector.shape_cast %0 : vector<1x8x216xf32> to vector<8x216xf32>
    %2 = arith.truncf %1 : vector<8x216xf32> to vector<8x216xbf16>
    %c0_2 = arith.constant 0 : index
    %c0_3 = arith.constant 0 : index
    %3 = vector.load %arg3[%c0_2, %c0_3] : memref<216x128xbf16, #tpu.memory_space<vmem>>, vector<216x128xbf16>
    %cst = arith.constant dense<0.000000e+00> : vector<8x128xf32>
    %4 = tpu.matmul %2, %3, %cst {dimension_numbers = #tpu.dot_dimension_numbers<[1], [0], [0], [1], [0, 0, 1, 1], [], []>} : vector<8x216xbf16>, vector<216x128xbf16>, vector<8x128xf32> -> vector<8x128xf32>
    %c0_4 = arith.constant 0 : index
    %c0_5 = arith.constant 0 : index
    %5 = vector.load %arg4[%c0_4, %c0_5] : memref<1x128xf32, #tpu.memory_space<vmem>>, vector<1x128xf32>
    %6 = vector.broadcast %5 : vector<1x128xf32> to vector<8x128xf32>
    %7 = arith.addf %4, %6 : vector<8x128xf32>
    %cst_6 = arith.constant 1.000000e-01 : f32
    %8 = vector.broadcast %cst_6 : f32 to vector<8x128xf32>
    %9 = arith.mulf %8, %7 : vector<8x128xf32>
    %10 = arith.maximumf %7, %9 : vector<8x128xf32>
    %11 = arith.truncf %10 : vector<8x128xf32> to vector<8x128xbf16>
    %c0_7 = arith.constant 0 : index
    %c0_8 = arith.constant 0 : index
    %12 = vector.load %arg5[%c0_7, %c0_8] : memref<128x384xbf16, #tpu.memory_space<vmem>>, vector<128x384xbf16>
    %cst_9 = arith.constant dense<0.000000e+00> : vector<8x384xf32>
    %13 = tpu.matmul %11, %12, %cst_9 {dimension_numbers = #tpu.dot_dimension_numbers<[1], [0], [0], [1], [0, 0, 1, 1], [], []>} : vector<8x128xbf16>, vector<128x384xbf16>, vector<8x384xf32> -> vector<8x384xf32>
    %c0_10 = arith.constant 0 : index
    %c0_11 = arith.constant 0 : index
    %14 = vector.load %arg6[%c0_10, %c0_11] : memref<1x384xf32, #tpu.memory_space<vmem>>, vector<1x384xf32>
    %15 = vector.broadcast %14 : vector<1x384xf32> to vector<8x384xf32>
    %16 = arith.addf %13, %15 : vector<8x384xf32>
    %cst_12 = arith.constant 1.000000e-01 : f32
    %17 = vector.broadcast %cst_12 : f32 to vector<8x384xf32>
    %18 = arith.mulf %17, %16 : vector<8x384xf32>
    %19 = arith.maximumf %16, %18 : vector<8x384xf32>
    %20 = vector.shape_cast %19 : vector<8x384xf32> to vector<1x8x384xf32>
    %c0_13 = arith.constant 0 : index
    %c0_14 = arith.constant 0 : index
    %c0_15 = arith.constant 0 : index
    %21 = vector.load %arg7[%c0_13, %c0_14, %c0_15] : memref<1x8x384xf32, #tpu.memory_space<vmem>>, vector<1x8x384xf32>
    tpu.vector_store %arg7[%c0_13, %c0_14, %c0_15], %20 {strides = array<i32>} : memref<1x8x384xf32, #tpu.memory_space<vmem>>, vector<1x8x384xf32>,
    return
  }
  func.func @transform_0(%arg0: i32, %arg1: i32) -> (i32, i32, i32) {
    %c0_i32 = arith.constant 0 : i32
    %c0_i32_0 = arith.constant 0 : i32
    return %arg0, %arg1, %c0_i32 : i32, i32, i32
  }
  func.func @transform_1(%arg0: i32, %arg1: i32) -> (i32, i32) {
    %c0_i32 = arith.constant 0 : i32
    %c0_i32_0 = arith.constant 0 : i32
    %c0_i32_1 = arith.constant 0 : i32
    return %c0_i32, %c0_i32_0 : i32, i32
  }
  func.func @transform_2(%arg0: i32, %arg1: i32) -> (i32, i32) {
    %c0_i32 = arith.constant 0 : i32
    %c0_i32_0 = arith.constant 0 : i32
    %c0_i32_1 = arith.constant 0 : i32
    return %c0_i32, %c0_i32_0 : i32, i32
  }
  func.func @transform_3(%arg0: i32, %arg1: i32) -> (i32, i32) {
    %c0_i32 = arith.constant 0 : i32
    %c0_i32_0 = arith.constant 0 : i32
    %c0_i32_1 = arith.constant 0 : i32
    return %c0_i32, %c0_i32_0 : i32, i32
  }
  func.func @transform_4(%arg0: i32, %arg1: i32) -> (i32, i32) {
    %c0_i32 = arith.constant 0 : i32
    %c0_i32_0 = arith.constant 0 : i32
    %c0_i32_1 = arith.constant 0 : i32
    return %c0_i32, %c0_i32_0 : i32, i32
  }
  func.func @transform_5(%arg0: i32, %arg1: i32) -> (i32, i32, i32) {
    %c0_i32 = arith.constant 0 : i32
    %c0_i32_0 = arith.constant 0 : i32
    return %arg0, %arg1, %c0_i32 : i32, i32, i32
  }
}

</mosaic_0001>

<llo_original>
// kernel: tile.14
$region0: #{tile.14}
  #allocation0 [shape = 's32[1]{0}', space=sflag, size = 0x4, scoped, tag = 'scoped memory for tile.14']
  %s0 = inlined_call_operand.vmem [shape: f32[24], index: 0, kind: input, shape index: {}]
  %s1 = inlined_call_operand.vmem [shape: f32[16,24], index: 1, kind: output, shape index: {}]
  // Predicated region
  $region2: #{tile.14} parent=0 // pred_check
    _
  $region3: #{tile.14} parent=0 // pred_check_branch
    %3 = sbr.rel (0) target = $region5
  $region4: #{tile.14} parent=0 // pred_region
    _
  $region5: #{tile.14} parent=0 // pred_fallthru
    _
  %v4 = vld [vmem:[%s0] ss:$0 sm:$0xff]
  %5 = vst [vmem:[%s1] sm:$0xff] %v4
  %s6 = scalar_lea.vmem %s1, 8
  %7 = vst [vmem:[%s6] sm:$0xff] %v4

// kernel: tile.15
$region0: #{tile.15}
  %s0 = inlined_call_operand.vmem [shape: f32[16,24], index: 0, kind: input, shape index: {}]
  %s1 = inlined_call_operand.vmem [shape: f32[1,384], index: 1, kind: output, shape index: {}]
  $region1: #{tile.15} parent=0
    #allocation0 [shape = 'u8[12288]{0}', space=vmem, size = 0x3000, scoped, tag = 'scoped mem for output reshape']
    %v2 = vld [vmem:[%s0] sm:$0x1]
    %vm3 = vcmask 195584
    %4 = vst.msk [vmem:[#allocation0] sm:$0x1] %vm3, %v2
    %s5 = scalar_lea.vmem %s0, 5
    %v6 = vld [vmem:[%s5] sm:$0x1]
    %s7 = scalar_lea.vmem %s0, 5
    %v8 = vld [vmem:[%s7] sm:$0x1]
    %vm9 = vcmask 64512
    %v10 = vsel %vm9, %v8, %v6
    %11 = vrot.lane.b32.xlu0 %v10, 120
    %v12 = vpop.permute.xlu0 %11
    %vm13 = vcmask 130048
    %s14 = scalar_lea.vmem [#allocation0], 8
    %15 = vst.msk [vmem:[%s14] sm:$0x1] %vm13, %v12
    %vm16 = vcmask 1048512
    %17 = vst.msk [vmem:[#allocation0] sm:$0x1] %vm16, %v12
    %s18 = scalar_lea.vmem %s0, 10
    %v19 = vld [vmem:[%s18] sm:$0x1]
    %s20 = scalar_lea.vmem %s0, 10
    %v21 = vld [vmem:[%s20] sm:$0x1]
    %vm22 = vcmask 130048
    %v23 = vsel %vm22, %v21, %v19
    %24 = vrot.lane.b32.xlu0 %v23, 112
    %v25 = vpop.permute.xlu0 %24
    %vm26 = vcmask 64512
    %s27 = scalar_lea.vmem [#allocation0], 16
    %28 = vst.msk [vmem:[%s27] sm:$0x1] %vm26, %v25
    %vm29 = vcmask 1048448
    %s30 = scalar_lea.vmem [#allocation0], 8
    %31 = vst.msk [vmem:[%s30] sm:$0x1] %vm29, %v25
    %s32 = scalar_lea.vmem %s0, 15
    %v33 = vld [vmem:[%s32] sm:$0x1]
    %34 = vrot.lane.b32.xlu0 %v33, 104
    %v35 = vpop.permute.xlu0 %34
    %vm36 = vcmask 1048384
    %s37 = scalar_lea.vmem [#allocation0], 16
    %38 = vst.msk [vmem:[%s37] sm:$0x1] %vm36, %v35
    %s39 = scalar_lea.vmem %s0, 4
    %v40 = vld [vmem:[%s39] sm:$0x1]
    %41 = vrot.lane.b32.xlu0 %v40, 96
    %v42 = vpop.permute.xlu0 %41
    %vm43 = vcmask 982784
    %44 = vst.msk [vmem:[#allocation0] sm:$0x1] %vm43, %v42
    %s45 = scalar_lea.vmem %s0, 9
    %v46 = vld [vmem:[%s45] sm:$0x1]
    %47 = vrot.lane.b32.xlu0 %v46, 88
    %v48 = vpop.permute.xlu0 %47
    %vm49 = vcmask 917184
    %s50 = scalar_lea.vmem [#allocation0], 8
    %51 = vst.msk [vmem:[%s50] sm:$0x1] %vm49, %v48
    %s52 = scalar_lea.vmem %s0, 14
    %v53 = vld [vmem:[%s52] sm:$0x1]
    %54 = vrot.lane.b32.xlu0 %v53, 80
    %v55 = vpop.permute.xlu0 %54
    %vm56 = vcmask 851584
    %s57 = scalar_lea.vmem [#allocation0], 16
    %58 = vst.msk [vmem:[%s57] sm:$0x1] %vm56, %v55
    %s59 = scalar_lea.vmem %s0, 3
    %v60 = vld [vmem:[%s59] sm:$0x1]
    %61 = vrot.lane.b32.xlu0 %v60, 72
    %v62 = vpop.permute.xlu0 %61
    %vm63 = vcmask 785984
    %64 = vst.msk [vmem:[#allocation0] sm:$0x1] %vm63, %v62
    %s65 = scalar_lea.vmem %s0, 8
    %v66 = vld [vmem:[%s65] sm:$0x1]
    %67 = vrot.lane.b32.xlu0 %v66, 64
    %v68 = vpop.permute.xlu0 %67
    %vm69 = vcmask 720384
    %s70 = scalar_lea.vmem [#allocation0], 8
    %71 = vst.msk [vmem:[%s70] sm:$0x1] %vm69, %v68
    %s72 = scalar_lea.vmem %s0, 13
    %v73 = vld [vmem:[%s72] sm:$0x1]
    %74 = vrot.lane.b32.xlu0 %v73, 56
    %v75 = vpop.permute.xlu0 %74
    %vm76 = vcmask 654784
    %s77 = scalar_lea.vmem [#allocation0], 16
    %78 = vst.msk [vmem:[%s77] sm:$0x1] %vm76, %v75
    %s79 = scalar_lea.vmem %s0, 2
    %v80 = vld [vmem:[%s79] sm:$0x1]
    %81 = vrot.lane.b32.xlu0 %v80, 48
    %v82 = vpop.permute.xlu0 %81
    %vm83 = vcmask 589184
    %84 = vst.msk [vmem:[#allocation0] sm:$0x1] %vm83, %v82
    %s85 = scalar_lea.vmem %s0, 7
    %v86 = vld [vmem:[%s85] sm:$0x1]
    %87 = vrot.lane.b32.xlu0 %v86, 40
    %v88 = vpop.permute.xlu0 %87
    %vm89 = vcmask 523584
    %s90 = scalar_lea.vmem [#allocation0], 8
    %91 = vst.msk [vmem:[%s90] sm:$0x1] %vm89, %v88
    %s92 = scalar_lea.vmem %s0, 12
    %v93 = vld [vmem:[%s92] sm:$0x1]
    %94 = vrot.lane.b32.xlu0 %v93, 32
    %v95 = vpop.permute.xlu0 %94
    %vm96 = vcmask 457984
    %s97 = scalar_lea.vmem [#allocation0], 16
    %98 = vst.msk [vmem:[%s97] sm:$0x1] %vm96, %v95
    %s99 = scalar_lea.vmem %s0, 1
    %v100 = vld [vmem:[%s99] sm:$0x1]
    %101 = vrot.lane.b32.xlu0 %v100, 24
    %v102 = vpop.permute.xlu0 %101
    %vm103 = vcmask 392384
    %104 = vst.msk [vmem:[#allocation0] sm:$0x1] %vm103, %v102
    %s105 = scalar_lea.vmem %s0, 6
    %v106 = vld [vmem:[%s105] sm:$0x1]
    %107 = vrot.lane.b32.xlu0 %v106, 16
    %v108 = vpop.permute.xlu0 %107
    %vm109 = vcmask 326784
    %s110 = scalar_lea.vmem [#allocation0], 8
    %111 = vst.msk [vmem:[%s110] sm:$0x1] %vm109, %v108
    %s112 = scalar_lea.vmem %s0, 11
    %v113 = vld [vmem:[%s112] sm:$0x1]
    %114 = vrot.lane.b32.xlu0 %v113, 8
    %v115 = vpop.permute.xlu0 %114
    %vm116 = vcmask 261184
    %s117 = scalar_lea.vmem [#allocation0], 16
    %118 = vst.msk [vmem:[%s117] sm:$0x1] %vm116, %v115
    %s120 = sshll.u32 1, 1
    %s121 = ssub.s32 %s120, 1
    %v123 = vld [vmem:[#allocation0] sm:%s121]
    %s124 = sshll.u32 1, 1
    %s125 = ssub.s32 %s124, 1
    %126 = vst [vmem:[%s1] sm:%s125] %v123
    %s127 = scalar_lea.vmem [#allocation0], 8
    %v128 = vld [vmem:[%s127] sm:%s121]
    %s129 = sshll.u32 1, 1
    %s130 = ssub.s32 %s129, 1
    %s131 = scalar_lea.vmem %s1, 1
    %132 = vst [vmem:[%s131] sm:%s130] %v128
    %s133 = scalar_lea.vmem [#allocation0], 16
    %v134 = vld [vmem:[%s133] sm:%s121]
    %s135 = sshll.u32 1, 1
    %s136 = ssub.s32 %s135, 1
    %s137 = smul.addr 1, 2
    %s138 = scalar_lea.vmem %s1, %s137
    %139 = vst [vmem:[%s138] sm:%s136] %v134

// kernel: tile.10
$region0: #{tile.10}
  #allocation0 [shape = 's32[1]{0}', space=sflag, size = 0x4, scoped, tag = 'scoped memory for tile.10']
  %s0 = inlined_call_operand.vmem [shape: f32[8], index: 0, kind: input, shape index: {}]
  %s1 = inlined_call_operand.vmem [shape: f32[16,8], index: 1, kind: output, shape index: {}]
  // Predicated region
  $region2: #{tile.10} parent=0 // pred_check
    _
  $region3: #{tile.10} parent=0 // pred_check_branch
    %3 = sbr.rel (0) target = $region5
  $region4: #{tile.10} parent=0 // pred_region
    _
  $region5: #{tile.10} parent=0 // pred_fallthru
    _
  %v4 = vld [vmem:[%s0] ss:$0 sm:$0xff]
  %5 = vst [vmem:[%s1] sm:$0xff] %v4
  %s6 = scalar_lea.vmem %s1, 8
  %7 = vst [vmem:[%s6] sm:$0xff] %v4

// kernel: tile.11
$region0: #{tile.11}
  %s0 = inlined_call_operand.vmem [shape: f32[16,8], index: 0, kind: input, shape index: {}]
  %s1 = inlined_call_operand.vmem [shape: f32[1,128], index: 1, kind: output, shape index: {}]
  $region1: #{tile.11} parent=0
    #allocation0 [shape = 'u8[4096]{0}', space=vmem, size = 0x1000, scoped, tag = 'scoped mem for output reshape']
    %v2 = vld [vmem:[%s0] sm:$0x1]
    %vm3 = vcmask 64512
    %4 = vst.msk [vmem:[#allocation0] sm:$0x1] %vm3, %v2
    %s5 = scalar_lea.vmem %s0, 15
    %v6 = vld [vmem:[%s5] sm:$0x1]
    %7 = vrot.lane.b32.xlu0 %v6, 120
    %v8 = vpop.permute.xlu0 %7
    %vm9 = vcmask 1048512
    %10 = vst.msk [vmem:[#allocation0] sm:$0x1] %vm9, %v8
    %s11 = scalar_lea.vmem %s0, 14
    %v12 = vld [vmem:[%s11] sm:$0x1]
    %13 = vrot.lane.b32.xlu0 %v12, 112
    %v14 = vpop.permute.xlu0 %13
    %vm15 = vcmask 982912
    %16 = vst.msk [vmem:[#allocation0] sm:$0x1] %vm15, %v14
    %s17 = scalar_lea.vmem %s0, 13
    %v18 = vld [vmem:[%s17] sm:$0x1]
    %19 = vrot.lane.b32.xlu0 %v18, 104
    %v20 = vpop.permute.xlu0 %19
    %vm21 = vcmask 917312
    %22 = vst.msk [vmem:[#allocation0] sm:$0x1] %vm21, %v20
    %s23 = scalar_lea.vmem %s0, 12
    %v24 = vld [vmem:[%s23] sm:$0x1]
    %25 = vrot.lane.b32.xlu0 %v24, 96
    %v26 = vpop.permute.xlu0 %25
    %vm27 = vcmask 851712
    %28 = vst.msk [vmem:[#allocation0] sm:$0x1] %vm27, %v26
    %s29 = scalar_lea.vmem %s0, 11
    %v30 = vld [vmem:[%s29] sm:$0x1]
    %31 = vrot.lane.b32.xlu0 %v30, 88
    %v32 = vpop.permute.xlu0 %31
    %vm33 = vcmask 786112
    %34 = vst.msk [vmem:[#allocation0] sm:$0x1] %vm33, %v32
    %s35 = scalar_lea.vmem %s0, 10
    %v36 = vld [vmem:[%s35] sm:$0x1]
    %37 = vrot.lane.b32.xlu0 %v36, 80
    %v38 = vpop.permute.xlu0 %37
    %vm39 = vcmask 720512
    %40 = vst.msk [vmem:[#allocation0] sm:$0x1] %vm39, %v38
    %s41 = scalar_lea.vmem %s0, 9
    %v42 = vld [vmem:[%s41] sm:$0x1]
    %43 = vrot.lane.b32.xlu0 %v42, 72
    %v44 = vpop.permute.xlu0 %43
    %vm45 = vcmask 654912
    %46 = vst.msk [vmem:[#allocation0] sm:$0x1] %vm45, %v44
    %s47 = scalar_lea.vmem %s0, 8
    %v48 = vld [vmem:[%s47] sm:$0x1]
    %49 = vrot.lane.b32.xlu0 %v48, 64
    %v50 = vpop.permute.xlu0 %49
    %vm51 = vcmask 589312
    %52 = vst.msk [vmem:[#allocation0] sm:$0x1] %vm51, %v50
    %s53 = scalar_lea.vmem %s0, 7
    %v54 = vld [vmem:[%s53] sm:$0x1]
    %55 = vrot.lane.b32.xlu0 %v54, 56
    %v56 = vpop.permute.xlu0 %55
    %vm57 = vcmask 523712
    %58 = vst.msk [vmem:[#allocation0] sm:$0x1] %vm57, %v56
    %s59 = scalar_lea.vmem %s0, 6
    %v60 = vld [vmem:[%s59] sm:$0x1]
    %61 = vrot.lane.b32.xlu0 %v60, 48
    %v62 = vpop.permute.xlu0 %61
    %vm63 = vcmask 458112
    %64 = vst.msk [vmem:[#allocation0] sm:$0x1] %vm63, %v62
    %s65 = scalar_lea.vmem %s0, 5
    %v66 = vld [vmem:[%s65] sm:$0x1]
    %67 = vrot.lane.b32.xlu0 %v66, 40
    %v68 = vpop.permute.xlu0 %67
    %vm69 = vcmask 392512
    %70 = vst.msk [vmem:[#allocation0] sm:$0x1] %vm69, %v68
    %s71 = scalar_lea.vmem %s0, 4
    %v72 = vld [vmem:[%s71] sm:$0x1]
    %73 = vrot.lane.b32.xlu0 %v72, 32
    %v74 = vpop.permute.xlu0 %73
    %vm75 = vcmask 326912
    %76 = vst.msk [vmem:[#allocation0] sm:$0x1] %vm75, %v74
    %s77 = scalar_lea.vmem %s0, 3
    %v78 = vld [vmem:[%s77] sm:$0x1]
    %79 = vrot.lane.b32.xlu0 %v78, 24
    %v80 = vpop.permute.xlu0 %79
    %vm81 = vcmask 261312
    %82 = vst.msk [vmem:[#allocation0] sm:$0x1] %vm81, %v80
    %s83 = scalar_lea.vmem %s0, 2
    %v84 = vld [vmem:[%s83] sm:$0x1]
    %85 = vrot.lane.b32.xlu0 %v84, 16
    %v86 = vpop.permute.xlu0 %85
    %vm87 = vcmask 195712
    %88 = vst.msk [vmem:[#allocation0] sm:$0x1] %vm87, %v86
    %s89 = scalar_lea.vmem %s0, 1
    %v90 = vld [vmem:[%s89] sm:$0x1]
    %91 = vrot.lane.b32.xlu0 %v90, 8
    %v92 = vpop.permute.xlu0 %91
    %vm93 = vcmask 130112
    %94 = vst.msk [vmem:[#allocation0] sm:$0x1] %vm93, %v92
    %s96 = sshll.u32 1, 1
    %s97 = ssub.s32 %s96, 1
    %v99 = vld [vmem:[#allocation0] sm:%s97]
    %s100 = sshll.u32 1, 1
    %s101 = ssub.s32 %s100, 1
    %102 = vst [vmem:[%s1] sm:%s101] %v99

// kernel: _lambda_.1
$region0: #{_lambda_.1}
  #allocation0 [shape = 'u32[]', space=smem, size = 0x4, offset = 0x4, fixed_abs, tag = 'smem constant byte address 0x4 - core index']
  #allocation1 [shape = 'u32[144,128]{1,0:T(1,128)}', space=vmem, size = 0x12000, scoped, tag = 'internal scratch']
  %s0 = inlined_call_operand.vmem [shape: f32[2,16,216], index: 0, kind: input, shape index: {}]
  %s1 = inlined_call_operand.vmem [shape: bf16[216,128], index: 1, kind: input, shape index: {}]
  %s2 = inlined_call_operand.vmem [shape: f32[1,128], index: 2, kind: input, shape index: {}]
  %s3 = inlined_call_operand.vmem [shape: bf16[128,384], index: 3, kind: input, shape index: {}]
  %s4 = inlined_call_operand.vmem [shape: f32[1,384], index: 4, kind: input, shape index: {}]
  %s5 = inlined_call_operand.vmem [shape: f32[2,16,384], index: 5, kind: output, shape index: {}]
  %s6 = sld [smem:[#allocation0]]
  $region53: #{_lambda_.1} parent=0
    _
  %s8 = ssub.s32 1, %s6
  %s9 = scalar_select 0, %s8, %s6
  loop: start=0, step=1, limit=6
  $region2: #{_lambda_.1} parent=0 // loop_pre_header
    _
  $region3: #{_lambda_.1} parent=0 // loop_header
    %s11 = sphi 0, %s15
    %p12 = scmp.ge.s32.totalorder %s11, 6
    %s18 = sphi 0, %s30
    %s19 = sphi 0, %s26
    %s20 = sphi 0, %s18
    %s21 = sphi 0, %s19
    %s22 = sphi 0, %s20
    %s23 = sphi 0, %s21
    %s35 = sphi 0, %s37
    %s38 = sphi 0, %s35
    %s39 = sphi 0, %s38
    %s55 = sphi 0, %s39
    %s59 = sphi 0, %s59
    %s61 = sphi 0, %s59
    %s62 = sphi 0, %s61
    %s76 = sphi 0, %s62
    %s80 = sphi 0, %s80
    %s82 = sphi 0, %s80
    %s83 = sphi 0, %s82
    %s97 = sphi 0, %s83
    %s101 = sphi 0, %s101
    %s103 = sphi 0, %s101
    %s104 = sphi 0, %s103
    %s118 = sphi 0, %s104
    %s122 = sphi 0, %s122
    %s124 = sphi 0, %s122
    %s125 = sphi 0, %s124
    %s139 = sphi 0, %s125
    %s147 = sphi 0, %s149
    %s150 = sphi 0, %s147
    %s151 = sphi 0, %s150
    %s167 = sphi 0, %s151
  $region4: #{_lambda_.1} parent=0 // loop_header_branch
    %14 = sbr.rel (%p12) target = $region8
  $region5: #{_lambda_.1} parent=0 // loop_body
    %s16 = ssub.s32 %s11, 1
    %s17 = ssub.s32 %s11, 2
    %s24 = sadd.s32 1, %s19
    %p25 = scmp.ge.s32.totalorder %s24, 2
    %s26 = scalar_select %p25, 0, %s24
    %s27 = sadd.s32 1, %s18
    %s28 = scalar_select %p25, %s27, %s18
    %p29 = scmp.ge.s32.totalorder %s28, 2
    %s30 = scalar_select %p29, 0, %s28
    %s31 = ssub.s32 %s18, %s30
    %s32 = ssub.s32 %s19, %s26
    %s33 = sor.u32 %s31, %s32
    %p34 = scmp.eq.s32.totalorder %s33, 0
    %s36 = sadd.s32 %s35, 1
    %s37 = scalar_select %p34, %s35, %s36
    %p40 = pneg %p34
    %p41 = scmp.eq.s32.totalorder %s11, 3
    %p42 = por %p40, %p41
    %p43 = scmp.ne.s32.totalorder %s35, %s38
    %p44 = scmp.eq.s32.totalorder %s11, 0
    %p45 = por %p43, %p44
    %p46 = scmp.ne.s32.totalorder %s35, %s38
    %p47 = scmp.eq.s32.totalorder %s16, 3
    %p48 = por %p46, %p47
    %p49 = scmp.ne.s32.totalorder %s38, %s39
    %p50 = scmp.eq.s32.totalorder %s16, 0
    %p51 = por %p49, %p50
    %p52 = scmp.ne.s32.totalorder %s38, %s39
    %p53 = scmp.eq.s32.totalorder %s17, 3
    %p54 = por %p52, %p53
    %p56 = scmp.ne.s32.totalorder %s39, %s55
    %p57 = scmp.eq.s32.totalorder %s17, 0
    %p58 = por %p56, %p57
    %s60 = sadd.s32 %s59, 1
    %p63 = scmp.eq.s32.totalorder %s11, 3
    %p64 = scmp.ne.s32.totalorder %s59, %s61
    %p65 = scmp.eq.s32.totalorder %s11, 0
    %p66 = por %p64, %p65
    %p67 = scmp.ne.s32.totalorder %s59, %s61
    %p68 = scmp.eq.s32.totalorder %s16, 3
    %p69 = por %p67, %p68
    %p70 = scmp.ne.s32.totalorder %s61, %s62
    %p71 = scmp.eq.s32.totalorder %s16, 0
    %p72 = por %p70, %p71
    %p73 = scmp.ne.s32.totalorder %s61, %s62
    %p74 = scmp.eq.s32.totalorder %s17, 3
    %p75 = por %p73, %p74
    %p77 = scmp.ne.s32.totalorder %s62, %s76
    %p78 = scmp.eq.s32.totalorder %s17, 0
    %p79 = por %p77, %p78
    %s81 = sadd.s32 %s80, 1
    %p84 = scmp.eq.s32.totalorder %s11, 3
    %p85 = scmp.ne.s32.totalorder %s80, %s82
    %p86 = scmp.eq.s32.totalorder %s11, 0
    %p87 = por %p85, %p86
    %p88 = scmp.ne.s32.totalorder %s80, %s82
    %p89 = scmp.eq.s32.totalorder %s16, 3
    %p90 = por %p88, %p89
    %p91 = scmp.ne.s32.totalorder %s82, %s83
    %p92 = scmp.eq.s32.totalorder %s16, 0
    %p93 = por %p91, %p92
    %p94 = scmp.ne.s32.totalorder %s82, %s83
    %p95 = scmp.eq.s32.totalorder %s17, 3
    %p96 = por %p94, %p95
    %p98 = scmp.ne.s32.totalorder %s83, %s97
    %p99 = scmp.eq.s32.totalorder %s17, 0
    %p100 = por %p98, %p99
    %s102 = sadd.s32 %s101, 1
    %p105 = scmp.eq.s32.totalorder %s11, 3
    %p106 = scmp.ne.s32.totalorder %s101, %s103
    %p107 = scmp.eq.s32.totalorder %s11, 0
    %p108 = por %p106, %p107
    %p109 = scmp.ne.s32.totalorder %s101, %s103
    %p110 = scmp.eq.s32.totalorder %s16, 3
    %p111 = por %p109, %p110
    %p112 = scmp.ne.s32.totalorder %s103, %s104
    %p113 = scmp.eq.s32.totalorder %s16, 0
    %p114 = por %p112, %p113
    %p115 = scmp.ne.s32.totalorder %s103, %s104
    %p116 = scmp.eq.s32.totalorder %s17, 3
    %p117 = por %p115, %p116
    %p119 = scmp.ne.s32.totalorder %s104, %s118
    %p120 = scmp.eq.s32.totalorder %s17, 0
    %p121 = por %p119, %p120
    %s123 = sadd.s32 %s122, 1
    %p126 = scmp.eq.s32.totalorder %s11, 3
    %p127 = scmp.ne.s32.totalorder %s122, %s124
    %p128 = scmp.eq.s32.totalorder %s11, 0
    %p129 = por %p127, %p128
    %p130 = scmp.ne.s32.totalorder %s122, %s124
    %p131 = scmp.eq.s32.totalorder %s16, 3
    %p132 = por %p130, %p131
    %p133 = scmp.ne.s32.totalorder %s124, %s125
    %p134 = scmp.eq.s32.totalorder %s16, 0
    %p135 = por %p133, %p134
    %p136 = scmp.ne.s32.totalorder %s124, %s125
    %p137 = scmp.eq.s32.totalorder %s17, 3
    %p138 = por %p136, %p137
    %p140 = scmp.ne.s32.totalorder %s125, %s139
    %p141 = scmp.eq.s32.totalorder %s17, 0
    %p142 = por %p140, %p141
    %s143 = ssub.s32 %s18, %s30
    %s144 = ssub.s32 %s19, %s26
    %s145 = sor.u32 %s143, %s144
    %p146 = scmp.eq.s32.totalorder %s145, 0
    %s148 = sadd.s32 %s147, 1
    %s149 = scalar_select %p146, %s147, %s148
    %p152 = pneg %p146
    %p153 = scmp.eq.s32.totalorder %s11, 3
    %p154 = por %p152, %p153
    %p155 = scmp.ne.s32.totalorder %s147, %s150
    %p156 = scmp.eq.s32.totalorder %s11, 0
    %p157 = por %p155, %p156
    %p158 = scmp.ne.s32.totalorder %s147, %s150
    %p159 = scmp.eq.s32.totalorder %s16, 3
    %p160 = por %p158, %p159
    %p161 = scmp.ne.s32.totalorder %s150, %s151
    %p162 = scmp.eq.s32.totalorder %s16, 0
    %p163 = por %p161, %p162
    %p164 = scmp.ne.s32.totalorder %s150, %s151
    %p165 = scmp.eq.s32.totalorder %s17, 3
    %p166 = por %p164, %p165
    %p168 = scmp.ne.s32.totalorder %s151, %s167
    %p169 = scmp.eq.s32.totalorder %s17, 0
    %p170 = por %p168, %p169
    %p171 = scmp.le.s32.totalorder 1, %s11
    %p172 = scmp.lt.s32.totalorder %s11, 5
    %p173 = pnand %p171, %p172
    %p174 = pneg %p173
    // Predicated region
    $region9: #{_lambda_.1} parent=5 // pred_check
      _
    $region10: #{_lambda_.1} parent=5 // pred_check_branch
      %176 = sbr.rel (%p173) target = $region12
    $region11: #{_lambda_.1} parent=5 // pred_region
      %s177 = ssub.s32 %s11, 1
      // Predicated region
      $region13: #{_lambda_.1} parent=11 // pred_check
        %p178 = pneg %p72
      $region14: #{_lambda_.1} parent=11 // pred_check_branch
        %180 = sbr.rel (%p178) target = $region16
      $region15: #{_lambda_.1} parent=11 // pred_region
        _
      $region16: #{_lambda_.1} parent=11 // pred_fallthru
        _
      // Predicated region
      $region17: #{_lambda_.1} parent=11 // pred_check
        %p181 = pneg %p93
      $region18: #{_lambda_.1} parent=11 // pred_check_branch
        %183 = sbr.rel (%p181) target = $region20
      $region19: #{_lambda_.1} parent=11 // pred_region
        _
      $region20: #{_lambda_.1} parent=11 // pred_fallthru
        _
      // Predicated region
      $region21: #{_lambda_.1} parent=11 // pred_check
        %p184 = pneg %p114
      $region22: #{_lambda_.1} parent=11 // pred_check_branch
        %186 = sbr.rel (%p184) target = $region24
      $region23: #{_lambda_.1} parent=11 // pred_region
        _
      $region24: #{_lambda_.1} parent=11 // pred_fallthru
        _
      // Predicated region
      $region25: #{_lambda_.1} parent=11 // pred_check
        %p187 = pneg %p135
      $region26: #{_lambda_.1} parent=11 // pred_check_branch
        %189 = sbr.rel (%p187) target = $region28
      $region27: #{_lambda_.1} parent=11 // pred_region
        _
      $region28: #{_lambda_.1} parent=11 // pred_fallthru
        _
    $region12: #{_lambda_.1} parent=5 // pred_fallthru
      _
    %p190 = scmp.lt.s32.totalorder %s11, 4
    // Predicated region
    $region29: #{_lambda_.1} parent=5 // pred_check
      %p191 = pneg %p190
    $region30: #{_lambda_.1} parent=5 // pred_check_branch
      %193 = sbr.rel (%p191) target = $region32
    $region31: #{_lambda_.1} parent=5 // pred_region
      // Predicated region
      $region33: #{_lambda_.1} parent=31 // pred_check
        %p194 = pneg %p45
      $region34: #{_lambda_.1} parent=31 // pred_check_branch
        %196 = sbr.rel (%p194) target = $region36
      $region35: #{_lambda_.1} parent=31 // pred_region
        %p197 = scmp.lt.s32.totalorder %s18, 1
        %s198 = scalar_select %p197, %s18, 1
        %p199 = scmp.lt.s32.totalorder %s19, 1
        %s200 = scalar_select %p199, %s19, 1
        %s201 = smul.addr %s200, 2
        %s202 = smul.addr %s198, 4
        %s203 = sadd.s32 %s201, %s202
        %s204 = smul.addr %s203, 8
        %s205 = scalar_lea.vmem %s0, %s204
      $region36: #{_lambda_.1} parent=31 // pred_fallthru
        _
    $region32: #{_lambda_.1} parent=5 // pred_fallthru
      _
    %p206 = scmp.le.s32.totalorder 1, %s11
    %p207 = scmp.lt.s32.totalorder %s11, 5
    %p208 = pnand %p206, %p207
    %p209 = pneg %p208
    // Predicated region
    $region37: #{_lambda_.1} parent=5 // pred_check
      _
    $region38: #{_lambda_.1} parent=5 // pred_check_branch
      %211 = sbr.rel (%p208) target = $region40
    $region39: #{_lambda_.1} parent=5 // pred_region
      %s212 = ssub.s32 %s11, 1
      %p213 = scmp.lt.s32.totalorder %s20, 1
      %s214 = scalar_select %p213, %s20, 1
      %p215 = scmp.lt.s32.totalorder %s21, 1
      %s216 = scalar_select %p215, %s21, 1
      %s217 = smul.addr %s216, 2
      %s218 = smul.addr %s214, 4
      %s219 = sadd.s32 %s217, %s218
      %s220 = smul.addr %s219, 8
      %s221 = scalar_lea.vmem %s0, %s220
      %p222 = pneg %p51
      %p223 = pneg %p48
      %p224 = pneg %p72
      %p225 = pneg %p69
      %p226 = pneg %p93
      %p227 = pneg %p90
      %p228 = pneg %p114
      %p229 = pneg %p111
      %p230 = pneg %p135
      %p231 = pneg %p132
      %p232 = pneg %p163
      %p233 = pneg %p160
      %p234 = scmp.lt.s32.totalorder %s20, 1
      %s235 = scalar_select %p234, %s20, 1
      %p236 = scmp.lt.s32.totalorder %s21, 1
      %s237 = scalar_select %p236, %s21, 1
      %s238 = smul.addr %s237, 3
      %s239 = smul.addr %s235, 6
      %s240 = sadd.s32 %s238, %s239
      %s241 = smul.addr %s240, 8
      %s242 = scalar_lea.vmem %s5, %s241
      %p243 = scmp.lt.s32.totalorder %s20, 1
      %s244 = scalar_select %p243, %s20, 1
      %p245 = scmp.lt.s32.totalorder %s21, 1
      %s246 = scalar_select %p245, %s21, 1
      %s247 = smul.addr %s246, 2
      %s248 = smul.addr %s244, 4
      %s249 = sadd.s32 %s247, %s248
      %s250 = smul.addr %s249, 8
      %s251 = scalar_lea.vmem %s0, %s250
      %p252 = scmp.lt.s32.totalorder %s20, 1
      %s253 = scalar_select %p252, %s20, 1
      %p254 = scmp.lt.s32.totalorder %s21, 1
      %s255 = scalar_select %p254, %s21, 1
      %s256 = smul.addr %s255, 3
      %s257 = smul.addr %s253, 6
      %s258 = sadd.s32 %s256, %s257
      %s259 = smul.addr %s258, 8
      %s260 = scalar_lea.vmem %s5, %s259
      %v262 = vld [vmem:[%s251] sm:$0xff]
      %v263 = vld [vmem:[%s251 + $0x8] sm:$0xff]
      %v264 = vpack.c.bf16 %v262, %v262
      %v265 = vpack.c.bf16 %v263, %v263
      %v266 = vld [vmem:[%s1] sm:$0xf]
      %v267 = vld [vmem:[%s1 + $0x4] sm:$0xf]
      %v268 = vld [vmem:[%s1 + $0x8] sm:$0xf]
      %v269 = vld [vmem:[%s1 + $0xc] sm:$0xf]
      %v270 = vld [vmem:[%s1 + $0x10] sm:$0xf]
      %v271 = vld [vmem:[%s1 + $0x14] sm:$0xf]
      %v272 = vld [vmem:[%s1 + $0x18] sm:$0xf]
      %v273 = vld [vmem:[%s1 + $0x1c] sm:$0xf]
      %v274 = vld [vmem:[%s1 + $0x20] sm:$0xf]
      %v275 = vld [vmem:[%s1 + $0x24] sm:$0xf]
      %v276 = vld [vmem:[%s1 + $0x28] sm:$0xf]
      %v277 = vld [vmem:[%s1 + $0x2c] sm:$0xf]
      %v278 = vld [vmem:[%s1 + $0x30] sm:$0xf]
      %v279 = vld [vmem:[%s1 + $0x34] sm:$0xf]
      %v280 = vld [vmem:[%s1 + $0x38] sm:$0xf]
      %v281 = vld [vmem:[%s1 + $0x3c] sm:$0xf]
      %v282 = vld [vmem:[%s1 + $0x40] sm:$0xf]
      %v283 = vld [vmem:[%s1 + $0x44] sm:$0xf]
      %v284 = vld [vmem:[%s1 + $0x48] sm:$0xf]
      %v285 = vld [vmem:[%s1 + $0x4c] sm:$0xf]
      %v286 = vld [vmem:[%s1 + $0x50] sm:$0xf]
      %v287 = vld [vmem:[%s1 + $0x54] sm:$0xf]
      %v288 = vld [vmem:[%s1 + $0x58] sm:$0xf]
      %v289 = vld [vmem:[%s1 + $0x5c] sm:$0xf]
      %v290 = vld [vmem:[%s1 + $0x60] sm:$0xf]
      %v291 = vld [vmem:[%s1 + $0x64] sm:$0xf]
      %v292 = vld [vmem:[%s1 + $0x68] sm:$0xf]
      %v293 = vld [vmem:[%s2] sm:$0x1]
      %v295 = vlaneseq
      %v296 = vshrl.u32 %v295, 7
      %v297 = vsub.s32 0, %v296
      %v298 = vrot.slane %v293, %v297
      %v327 = vunpack.c.l.b16 %v266
      %v328 = vunpack.c.l.b16 %v267
      %v329 = vunpack.c.l.b16 %v268
      %v330 = vunpack.c.l.b16 %v269
      %v331 = vunpack.c.l.b16 %v270
      %v332 = vunpack.c.l.b16 %v271
      %v333 = vunpack.c.l.b16 %v272
      %v334 = vunpack.c.l.b16 %v273
      %v335 = vunpack.c.l.b16 %v274
      %v336 = vunpack.c.l.b16 %v275
      %v337 = vunpack.c.l.b16 %v276
      %v338 = vunpack.c.l.b16 %v277
      %v339 = vunpack.c.l.b16 %v278
      %v340 = vunpack.c.l.b16 %v279
      %v341 = vunpack.c.l.b16 %v280
      %v342 = vunpack.c.l.b16 %v281
      %v343 = vunpack.c.l.b16 %v282
      %v344 = vunpack.c.l.b16 %v283
      %v345 = vunpack.c.l.b16 %v284
      %v346 = vunpack.c.l.b16 %v285
      %v347 = vunpack.c.l.b16 %v286
      %v348 = vunpack.c.l.b16 %v287
      %v349 = vunpack.c.l.b16 %v288
      %v350 = vunpack.c.l.b16 %v289
      %v351 = vunpack.c.l.b16 %v290
      %v352 = vunpack.c.l.b16 %v291
      %v353 = vunpack.c.l.b16 %v292
      %v354 = vpack.c.b16 %v328, %v327
      %v355 = vpack.c.b16 %v330, %v329
      %v356 = vpack.c.b16 %v332, %v331
      %v357 = vpack.c.b16 %v334, %v333
      %v358 = vpack.c.b16 %v336, %v335
      %v359 = vpack.c.b16 %v338, %v337
      %v360 = vpack.c.b16 %v340, %v339
      %v361 = vpack.c.b16 %v342, %v341
      %v362 = vpack.c.b16 %v344, %v343
      %v363 = vpack.c.b16 %v346, %v345
      %v364 = vpack.c.b16 %v348, %v347
      %v365 = vpack.c.b16 %v350, %v349
      %v366 = vpack.c.b16 %v352, %v351
      %v367 = vpack.c.b16 %v353, %v353
      %vm381 = vcmask 719872
      %v383 = vsel %vm381, %v265, 0
      %vm385 = vcmask 1043456
      %v387 = vsel %vm385, %v367, 0
      %389 = vmatprep.subr.bf16.mxu0 0
      %390 = vmatpush1.bf16.msra.mxu0 %v361
      %391 = vmatprep.subr.bf16.mxu0 0
      %392 = vmatpush1.bf16.msra.mxu0 %v360
      %393 = vmatprep.subr.bf16.mxu0 0
      %394 = vmatpush1.bf16.msra.mxu0 %v359
      %395 = vmatprep.subr.bf16.mxu0 0
      %396 = vmatpush1.bf16.msra.mxu0 %v358
      %397 = vmatprep.subr.bf16.mxu0 0
      %398 = vmatpush1.bf16.msra.mxu0 %v357
      %399 = vmatprep.subr.bf16.mxu0 0
      %400 = vmatpush1.bf16.msra.mxu0 %v356
      %401 = vmatprep.subr.bf16.mxu0 0
      %402 = vmatpush1.bf16.msra.mxu0 %v355
      %403 = vmatprep.subr.bf16.mxu0 0
      %404 = vmatpush1.bf16.msra.mxu0 %v354
      %405 = vmatprep.subr.bf16.mxu0 0
      %406 = vmatpush2.bf16.msra.mxu0 0
      %407 = vmatprep.subr.bf16.mxu0 0
      %408 = vmatpush2.bf16.msra.mxu0 0
      %409 = vmatprep.subr.bf16.mxu0 0
      %410 = vmatpush2.bf16.msra.mxu0 %v387
      %411 = vmatprep.subr.bf16.mxu0 0
      %412 = vmatpush2.bf16.msra.mxu0 %v366
      %413 = vmatprep.subr.bf16.mxu0 0
      %414 = vmatpush2.bf16.msra.mxu0 %v365
      %415 = vmatprep.subr.bf16.mxu0 0
      %416 = vmatpush2.bf16.msra.mxu0 %v364
      %417 = vmatprep.subr.bf16.mxu0 0
      %418 = vmatpush2.bf16.msra.mxu0 %v363
      %419 = vmatprep.subr.bf16.mxu0 0
      %420 = vmatpush2.bf16.msra.mxu0 %v362
      %421 = vmatprep.mubr.bf16.mxu0 %v383
      %422 = vmatmul.mubr.bf16.gmra.mxu0 %v264
      %v423 = vpop.f32.mrf.mxu0
      %v424 = vadd.f32 %v298, %v423
      %v425 = vpop.f32.mrf.mxu0
      %v426 = vpop.f32.mrf.mxu0
      %v427 = vpop.f32.mrf.mxu0
      %428 = vdwg.mxu0
      %v429 = vmul.f32 %v424, 0.1
      %v430 = vmax.f32 %v424, %v429
      %v431 = vpack.c.bf16 %v430, %v430
      %v432 = vld [vmem:[%s3] sm:$0xff]
      %v433 = vld [vmem:[%s3 + $0x8] sm:$0xf]
      %v434 = vld [vmem:[%s3 + $0xc] sm:$0xff]
      %v435 = vld [vmem:[%s3 + $0x14] sm:$0xf]
      %v436 = vld [vmem:[%s3 + $0x18] sm:$0xff]
      %v437 = vld [vmem:[%s3 + $0x20] sm:$0xf]
      %v438 = vld [vmem:[%s3 + $0x24] sm:$0xff]
      %v439 = vld [vmem:[%s3 + $0x2c] sm:$0xf]
      %v440 = vld [vmem:[%s3 + $0x30] sm:$0xff]
      %v441 = vld [vmem:[%s3 + $0x38] sm:$0xf]
      %v442 = vld [vmem:[%s3 + $0x3c] sm:$0xff]
      %v443 = vld [vmem:[%s3 + $0x44] sm:$0xf]
      %v444 = vld [vmem:[%s3 + $0x48] sm:$0xff]
      %v445 = vld [vmem:[%s3 + $0x50] sm:$0xf]
      %v446 = vld [vmem:[%s3 + $0x54] sm:$0xff]
      %v447 = vld [vmem:[%s3 + $0x5c] sm:$0xf]
      %v448 = vld [vmem:[%s3 + $0x60] sm:$0xff]
      %v449 = vld [vmem:[%s3 + $0x68] sm:$0xf]
      %v450 = vld [vmem:[%s3 + $0x6c] sm:$0xff]
      %v451 = vld [vmem:[%s3 + $0x74] sm:$0xf]
      %v452 = vld [vmem:[%s3 + $0x78] sm:$0xff]
      %v453 = vld [vmem:[%s3 + $0x80] sm:$0xf]
      %v454 = vld [vmem:[%s3 + $0x84] sm:$0xff]
      %v455 = vld [vmem:[%s3 + $0x8c] sm:$0xf]
      %v456 = vld [vmem:[%s3 + $0x90] sm:$0xff]
      %v457 = vld [vmem:[%s3 + $0x98] sm:$0xf]
      %v458 = vld [vmem:[%s3 + $0x9c] sm:$0xff]
      %v459 = vld [vmem:[%s3 + $0xa4] sm:$0xf]
      %v460 = vld [vmem:[%s3 + $0xa8] sm:$0xff]
      %v461 = vld [vmem:[%s3 + $0xb0] sm:$0xf]
      %v462 = vld [vmem:[%s3 + $0xb4] sm:$0xff]
      %v463 = vld [vmem:[%s3 + $0xbc] sm:$0xf]
      %v464 = vld [vmem:[%s4] sm:$0x7]
      %v466 = vlaneseq
      %v467 = vshrl.u32 %v466, 7
      %v468 = vsub.s32 0, %v467
      %v469 = vrot.slane %v464, %v468
      %v470 = vlaneseq
      %v471 = vshrl.u32 %v470, 7
      %v472 = vsub.s32 1, %v471
      %v473 = vrot.slane %v464, %v472
      %v474 = vlaneseq
      %v475 = vshrl.u32 %v474, 7
      %v476 = vsub.s32 2, %v475
      %v477 = vrot.slane %v464, %v476
      %v513 = vunpack.c.l.b16 %v432
      %v514 = vunpack.c.h.b16 %v432
      %v515 = vunpack.c.l.b16 %v433
      %v516 = vunpack.c.l.b16 %v434
      %v517 = vunpack.c.h.b16 %v434
      %v518 = vunpack.c.l.b16 %v435
      %v519 = vunpack.c.l.b16 %v436
      %v520 = vunpack.c.h.b16 %v436
      %v521 = vunpack.c.l.b16 %v437
      %v522 = vunpack.c.l.b16 %v438
      %v523 = vunpack.c.h.b16 %v438
      %v524 = vunpack.c.l.b16 %v439
      %v525 = vunpack.c.l.b16 %v440
      %v526 = vunpack.c.h.b16 %v440
      %v527 = vunpack.c.l.b16 %v441
      %v528 = vunpack.c.l.b16 %v442
      %v529 = vunpack.c.h.b16 %v442
      %v530 = vunpack.c.l.b16 %v443
      %v531 = vunpack.c.l.b16 %v444
      %v532 = vunpack.c.h.b16 %v444
      %v533 = vunpack.c.l.b16 %v445
      %v534 = vunpack.c.l.b16 %v446
      %v535 = vunpack.c.h.b16 %v446
      %v536 = vunpack.c.l.b16 %v447
      %v537 = vunpack.c.l.b16 %v448
      %v538 = vunpack.c.h.b16 %v448
      %v539 = vunpack.c.l.b16 %v449
      %v540 = vunpack.c.l.b16 %v450
      %v541 = vunpack.c.h.b16 %v450
      %v542 = vunpack.c.l.b16 %v451
      %v543 = vunpack.c.l.b16 %v452
      %v544 = vunpack.c.h.b16 %v452
      %v545 = vunpack.c.l.b16 %v453
      %v546 = vunpack.c.l.b16 %v454
      %v547 = vunpack.c.h.b16 %v454
      %v548 = vunpack.c.l.b16 %v455
      %v549 = vunpack.c.l.b16 %v456
      %v550 = vunpack.c.h.b16 %v456
      %v551 = vunpack.c.l.b16 %v457
      %v552 = vunpack.c.l.b16 %v458
      %v553 = vunpack.c.h.b16 %v458
      %v554 = vunpack.c.l.b16 %v459
      %v555 = vunpack.c.l.b16 %v460
      %v556 = vunpack.c.h.b16 %v460
      %v557 = vunpack.c.l.b16 %v461
      %v558 = vunpack.c.l.b16 %v462
      %v559 = vunpack.c.h.b16 %v462
      %v560 = vunpack.c.l.b16 %v463
      %v561 = vpack.c.b16 %v516, %v513
      %v562 = vpack.c.b16 %v517, %v514
      %v563 = vpack.c.b16 %v518, %v515
      %v564 = vpack.c.b16 %v522, %v519
      %v565 = vpack.c.b16 %v523, %v520
      %v566 = vpack.c.b16 %v524, %v521
      %v567 = vpack.c.b16 %v528, %v525
      %v568 = vpack.c.b16 %v529, %v526
      %v569 = vpack.c.b16 %v530, %v527
      %v570 = vpack.c.b16 %v534, %v531
      %v571 = vpack.c.b16 %v535, %v532
      %v572 = vpack.c.b16 %v536, %v533
      %v573 = vpack.c.b16 %v540, %v537
      %v574 = vpack.c.b16 %v541, %v538
      %v575 = vpack.c.b16 %v542, %v539
      %v576 = vpack.c.b16 %v546, %v543
      %v577 = vpack.c.b16 %v547, %v544
      %v578 = vpack.c.b16 %v548, %v545
      %v579 = vpack.c.b16 %v552, %v549
      %v580 = vpack.c.b16 %v553, %v550
      %v581 = vpack.c.b16 %v554, %v551
      %v582 = vpack.c.b16 %v558, %v555
      %v583 = vpack.c.b16 %v559, %v556
      %v584 = vpack.c.b16 %v560, %v557
      %609 = vmatprep.subr.bf16.mxu0 %v583
      %610 = vmatpush1.bf16.msra.mxu0 %v582
      %611 = vmatprep.subr.bf16.mxu0 %v580
      %612 = vmatpush1.bf16.msra.mxu0 %v579
      %613 = vmatprep.subr.bf16.mxu0 %v577
      %614 = vmatpush1.bf16.msra.mxu0 %v576
      %615 = vmatprep.subr.bf16.mxu0 %v574
      %616 = vmatpush1.bf16.msra.mxu0 %v573
      %617 = vmatprep.subr.bf16.mxu0 %v571
      %618 = vmatpush1.bf16.msra.mxu0 %v570
      %619 = vmatprep.subr.bf16.mxu0 %v568
      %620 = vmatpush1.bf16.msra.mxu0 %v567
      %621 = vmatprep.subr.bf16.mxu0 %v565
      %622 = vmatpush1.bf16.msra.mxu0 %v564
      %623 = vmatprep.subr.bf16.mxu0 %v562
      %624 = vmatpush1.bf16.msra.mxu0 %v561
      %625 = vmatprep.subr.bf16.mxu0 0
      %626 = vmatpush2.bf16.msra.mxu0 0
      %627 = vmatprep.subr.bf16.mxu0 0
      %628 = vmatpush2.bf16.msra.mxu0 0
      %629 = vmatprep.subr.bf16.mxu0 0
      %630 = vmatpush2.bf16.msra.mxu0 0
      %631 = vmatprep.subr.bf16.mxu0 0
      %632 = vmatpush2.bf16.msra.mxu0 0
      %633 = vmatprep.subr.bf16.mxu0 0
      %634 = vmatpush2.bf16.msra.mxu0 0
      %635 = vmatprep.subr.bf16.mxu0 0
      %636 = vmatpush2.bf16.msra.mxu0 0
      %637 = vmatprep.subr.bf16.mxu0 0
      %638 = vmatpush2.bf16.msra.mxu0 0
      %639 = vmatprep.subr.bf16.mxu0 0
      %640 = vmatpush2.bf16.msra.mxu0 0
      %641 = vmatprep.mubr.bf16.mxu0 0
      %642 = vmatmul.mubr.bf16.gmra.mxu0 %v431
      %v643 = vpop.f32.mrf.mxu0
      %v644 = vadd.f32 %v469, %v643
      %v645 = vpop.f32.mrf.mxu0
      %v646 = vadd.f32 %v473, %v645
      %v647 = vpop.f32.mrf.mxu0
      %v648 = vpop.f32.mrf.mxu0
      %649 = vdwg.mxu0
      %650 = vmatprep.subr.bf16.mxu0 0
      %651 = vmatpush1.bf16.msra.mxu0 %v584
      %652 = vmatprep.subr.bf16.mxu0 0
      %653 = vmatpush1.bf16.msra.mxu0 %v581
      %654 = vmatprep.subr.bf16.mxu0 0
      %655 = vmatpush1.bf16.msra.mxu0 %v578
      %656 = vmatprep.subr.bf16.mxu0 0
      %657 = vmatpush1.bf16.msra.mxu0 %v575
      %658 = vmatprep.subr.bf16.mxu0 0
      %659 = vmatpush1.bf16.msra.mxu0 %v572
      %660 = vmatprep.subr.bf16.mxu0 0
      %661 = vmatpush1.bf16.msra.mxu0 %v569
      %662 = vmatprep.subr.bf16.mxu0 0
      %663 = vmatpush1.bf16.msra.mxu0 %v566
      %664 = vmatprep.subr.bf16.mxu0 0
      %665 = vmatpush1.bf16.msra.mxu0 %v563
      %666 = vmatprep.subr.bf16.mxu0 0
      %667 = vmatpush2.bf16.msra.mxu0 0
      %668 = vmatprep.subr.bf16.mxu0 0
      %669 = vmatpush2.bf16.msra.mxu0 0
      %670 = vmatprep.subr.bf16.mxu0 0
      %671 = vmatpush2.bf16.msra.mxu0 0
      %672 = vmatprep.subr.bf16.mxu0 0
      %673 = vmatpush2.bf16.msra.mxu0 0
      %674 = vmatprep.subr.bf16.mxu0 0
      %675 = vmatpush2.bf16.msra.mxu0 0
      %676 = vmatprep.subr.bf16.mxu0 0
      %677 = vmatpush2.bf16.msra.mxu0 0
      %678 = vmatprep.subr.bf16.mxu0 0
      %679 = vmatpush2.bf16.msra.mxu0 0
      %680 = vmatprep.subr.bf16.mxu0 0
      %681 = vmatpush2.bf16.msra.mxu0 0
      %682 = vmatprep.mubr.bf16.mxu0 0
      %683 = vmatmul.mubr.bf16.gmra.mxu0 %v431
      %v684 = vpop.f32.mrf.mxu0
      %v685 = vadd.f32 %v477, %v684
      %v686 = vpop.f32.mrf.mxu0
      %v687 = vpop.f32.mrf.mxu0
      %v688 = vpop.f32.mrf.mxu0
      %689 = vdwg.mxu0
      %v690 = vmul.f32 %v644, 0.1
      %v691 = vmul.f32 %v646, 0.1
      %v692 = vmul.f32 %v685, 0.1
      %v693 = vmax.f32 %v644, %v690
      %v694 = vmax.f32 %v646, %v691
      %v695 = vmax.f32 %v685, %v692
      %696 = vst [vmem:[%s260] sm:$0xff] %v693
      %697 = vst [vmem:[%s260 + $0x8] sm:$0xff] %v694
      %698 = vst [vmem:[%s260 + $0x10] sm:$0xff] %v695
      %p699 = scmp.lt.s32.totalorder %s20, 1
      %s700 = scalar_select %p699, %s20, 1
      %p701 = scmp.lt.s32.totalorder %s21, 1
      %s702 = scalar_select %p701, %s21, 1
      %s703 = smul.addr %s702, 3
      %s704 = smul.addr %s700, 6
      %s705 = sadd.s32 %s703, %s704
      %s706 = smul.addr %s705, 8
      %s707 = scalar_lea.vmem %s5, %s706
      // Predicated region
      $region41: #{_lambda_.1} parent=39 // pred_check
        %p708 = pneg %p160
      $region42: #{_lambda_.1} parent=39 // pred_check_branch
        %710 = sbr.rel (%p708) target = $region44
      $region43: #{_lambda_.1} parent=39 // pred_region
        _
      $region44: #{_lambda_.1} parent=39 // pred_fallthru
        _
    $region40: #{_lambda_.1} parent=5 // pred_fallthru
      _
    %p711 = scmp.le.s32.totalorder 2, %s11
    // Predicated region
    $region45: #{_lambda_.1} parent=5 // pred_check
      %p712 = pneg %p711
    $region46: #{_lambda_.1} parent=5 // pred_check_branch
      %714 = sbr.rel (%p712) target = $region48
    $region47: #{_lambda_.1} parent=5 // pred_region
      %s715 = ssub.s32 %s11, 2
      // Predicated region
      $region49: #{_lambda_.1} parent=47 // pred_check
        %p716 = pneg %p166
      $region50: #{_lambda_.1} parent=47 // pred_check_branch
        %718 = sbr.rel (%p716) target = $region52
      $region51: #{_lambda_.1} parent=47 // pred_region
        %p719 = scmp.lt.s32.totalorder %s22, 1
        %s720 = scalar_select %p719, %s22, 1
        %p721 = scmp.lt.s32.totalorder %s23, 1
        %s722 = scalar_select %p721, %s23, 1
        %s723 = smul.addr %s722, 3
        %s724 = smul.addr %s720, 6
        %s725 = sadd.s32 %s723, %s724
        %s726 = smul.addr %s725, 8
        %s727 = scalar_lea.vmem %s5, %s726
      $region52: #{_lambda_.1} parent=47 // pred_fallthru
        _
    $region48: #{_lambda_.1} parent=5 // pred_fallthru
      _
  $region6: #{_lambda_.1} parent=0 // loop_footer
    %s15 = sadd.s32 1, %s11
  $region7: #{_lambda_.1} parent=0 // loop_footer_branch
    %10 = sbr.rel target = $region3
  $region8: #{_lambda_.1} parent=0 // loop_exit
    _

</llo_original>
